<compile_context>
chip_gen: v6e
topology: v6e:2x2x1
jax: 0.10.0
libtpu: 0.0.40
codegen_flags: <defaults>
</compile_context>

<pallas_src>
import math

import jax
import jax.numpy as jnp
from jax import lax
from jax.experimental import pallas as pl
from jax.experimental.pallas import tpu as pltpu
import numpy as np


# Below this many total elements the pallas_call launch overhead dominates a
# memory-bound add and XLA fuses it for free -> use the plain XLA path.
_MIN_PALLAS_ELEMS = 32 * 1024
# Target bytes per emb block: big enough to sit near the HBM roofline, small
# enough that 2x(in) + 2x(out) double buffers stay far under 16 MiB (v5e).
_TARGET_BLOCK_BYTES = 2 * 1024 * 1024
# Hard cap for one block (safety when S*D is huge and not 128-aligned).
_MAX_BLOCK_BYTES = 6 * 1024 * 1024


def _pe_add_kernel(emb_ref, pe_ref, out_ref):
    # emb_ref: (tb, TL)   pe_ref: (1, TL)   out_ref: (tb, TL)
    # One vectorized add + one lane-dense (TL % 128 == 0) store per tile.
    out_ref[...] = (emb_ref[...] + pe_ref[...]).astype(out_ref.dtype)


def make_positional_encoding(max_len, dim_embed, dtype=jnp.float32):
    """Same construction as PositionalEncoding.__init__ (dim_embed even)."""
    position = jnp.arange(max_len, dtype=jnp.float32)[:, None]
    div_term = jnp.exp(
        jnp.arange(0, dim_embed, 2, dtype=jnp.float32)
        * -(math.log(10000.0) / dim_embed)
    )
    angles = position * div_term                       # (max_len, dim_embed // 2)
    pe = jnp.zeros((max_len, dim_embed), jnp.float32)
    pe = pe.at[:, 0::2].set(jnp.sin(angles))
    pe = pe.at[:, 1::2].set(jnp.cos(angles))
    return pe.astype(dtype)


def _choose_tiles(B, L, itemsize):
    """Pick (tb, tl, grid) for the flattened (B, L) add."""
    pack = {4: 8, 2: 16, 1: 32}.get(itemsize, 8)       # sublane packing per dtype

    # Lane tile: multiple of 128 (unmasked stores); full extent if not aligned.
    if L % 128 == 0:
        tl = min(L, max(128, (_TARGET_BLOCK_BYTES // (pack * itemsize)) // 128 * 128))
    else:
        tl = L

    # Row tile: whole batch if it fits one packed group, else grow in
    # multiples of `pack` toward the target block size.
    if B <= pack:
        tb = B
    else:
        rows = max(pack, (_TARGET_BLOCK_BYTES // (tl * itemsize)) // pack * pack)
        tb = min(B, rows)

    grid = (pl.cdiv(B, tb), pl.cdiv(L, tl))

    # Give v7x's two TensorCores work to share even for single-block problems.
    if grid == (1, 1) and L >= 256 and L % 256 == 0:
        tl = L // 2
        grid = (1, 2)
    return tb, tl, grid


def positional_encoding_forward(emb, pe, step=None):
    """Pallas/JAX equivalent of PositionalEncoding.forward(emb, step)."""
    emb = jnp.asarray(emb)
    squeeze_seq = emb.ndim == 2                        # (B, D) decode-style input
    if squeeze_seq:
        emb = emb[:, None, :]

    B, S, D = emb.shape
    max_len, d_pe = pe.shape
    assert d_pe == D, "pe embedding dim mismatch"
    out_dtype = jnp.promote_types(emb.dtype, pe.dtype)  # match torch promotion

    # ---------------- decode / explicit-step path: pure XLA -----------------
    if step is not None:
        if isinstance(step, (int, np.integer)):
            assert 0 <= step < max_len, "step out of range"
            pe_row = pe[step][None, None, :]                          # (1, 1, D)
        else:
            # TODO(synk): a traced out-of-range step clamps (dynamic_slice
            # semantics) instead of raising like PyTorch indexing.
            step = jnp.asarray(step, jnp.int32)
            pe_row = lax.dynamic_slice(pe, (step, 0), (1, D))[None]   # (1, 1, D)
        out = (emb + pe_row).astype(out_dtype)          # XLA fuses this for free
        return out[:, 0, :] if squeeze_seq else out

    # ---------------- prefill / training path -------------------------------
    assert S <= max_len, "sequence length exceeds PE max_len"
    pe_block = pe[:S]                                   # only the window needed

    L = S * D
    itemsize = jnp.dtype(emb.dtype).itemsize
    tb, tl, grid = _choose_tiles(B, L, itemsize)

    use_pallas = (
        B * L >= _MIN_PALLAS_ELEMS                      # amortize launch overhead
        and L >= 128                                    # keep stores lane-dense
        and tb * tl * itemsize <= _MAX_BLOCK_BYTES      # VMEM-safe block
    )
    if not use_pallas:
        out = (emb + pe_block[None]).astype(out_dtype)
        return out[:, 0, :] if squeeze_seq else out

    emb2 = emb.reshape(B, L)                            # lane-dense layout
    pe2 = pe_block.reshape(1, L).astype(out_dtype)      # tiny PE slab

    out_itemsize = jnp.dtype(out_dtype).itemsize
    cost = pl.CostEstimate(
        flops=B * L,
        transcendentals=0,
        bytes_accessed=B * L * (itemsize + out_itemsize) + L * out_itemsize,
    )

    out2 = pl.pallas_call(
        _pe_add_kernel,
        out_shape=jax.ShapeDtypeStruct((B, L), out_dtype),
        grid=grid,
        in_specs=[
            pl.BlockSpec((tb, tl), lambda i, j: (i, j)),    # emb tile
            pl.BlockSpec((1, tl), lambda i, j: (0, j)),     # PE slab (const over i)
        ],
        out_specs=pl.BlockSpec((tb, tl), lambda i, j: (i, j)),
        compiler_params=pltpu.CompilerParams(
            dimension_semantics=("parallel", "parallel"),   # disjoint output tiles
        ),
        cost_estimate=cost,
    )(emb2, pe2)

    out = out2.reshape(B, S, D)
    return out[:, 0, :] if squeeze_seq else out


if __name__ == "__main__":
    key = jax.random.PRNGKey(0)
    k1, k2, k3 = jax.random.split(key, 3)

    # --- Case 1: prefill shape big enough to take the Pallas kernel ---------
    DIM, MAX_LEN = 128, 128
    B, S = 4, 128
    pe_big = make_positional_encoding(MAX_LEN, DIM)
    emb = jax.random.normal(k1, (B, S, DIM), jnp.float32)
    fwd = jax.jit(lambda e: positional_encoding_forward(e, pe_big))
    out = jax.block_until_ready(fwd(emb))
    ref = emb + pe_big[:S][None, :, :]
    np.testing.assert_allclose(np.asarray(out), np.asarray(ref), rtol=1e-6, atol=1e-6)

    # --- Case 2: tiny module-default shape -> XLA fast path ------------------
    pe_s = make_positional_encoding(100, 32)
    emb_s = jax.random.normal(k2, (2, 8, 32), jnp.float32)
    out_s = jax.block_until_ready(positional_encoding_forward(emb_s, pe_s))
    ref_s = emb_s + pe_s[:8][None, :, :]
    np.testing.assert_allclose(np.asarray(out_s), np.asarray(ref_s), rtol=1e-6, atol=1e-6)

    # --- Case 3: decode path, traced step under jit --------------------------
    emb_d = jax.random.normal(k3, (2, 1, 32), jnp.float32)
    decode = jax.jit(lambda e, s: positional_encoding_forward(e, pe_s, step=s))
    out_d = jax.block_until_ready(decode(emb_d, jnp.int32(3)))
    ref_d = emb_d + pe_s[3][None, None, :]
    np.testing.assert_allclose(np.asarray(out_d), np.asarray(ref_d), rtol=1e-6, atol=1e-6)

    print("KERNEL_OK")
</pallas_src>

<mosaic_0001>
module attributes {stable_mosaic.version = 11 : i64} {
  func.func @_pe_add_kernel(%arg0: i32, %arg1: i32, %arg2: memref<4x8192xf32, #tpu.memory_space<vmem>>, %arg3: memref<1x8192xf32, #tpu.memory_space<vmem>>, %arg4: memref<4x8192xf32, #tpu.memory_space<vmem>>) attributes {dimension_semantics = [#tpu.dimension_semantics<parallel>, #tpu.dimension_semantics<parallel>], iteration_bounds = array<i64: 1, 2>, scalar_prefetch = 0 : i64, scratch_operands = 0 : i64, tpu.core_type = #tpu.core_type<tc>, window_params = [{transform_indices = @transform_0, window_bounds = array<i64: 4, 8192>}, {transform_indices = @transform_1, window_bounds = array<i64: 1, 8192>}, {transform_indices = @transform_2, window_bounds = array<i64: 4, 8192>}]} {
    %c0 = arith.constant 0 : index
    %c0_0 = arith.constant 0 : index
    %0 = vector.load %arg2[%c0, %c0_0] : memref<4x8192xf32, #tpu.memory_space<vmem>>, vector<4x8192xf32>
    %c0_1 = arith.constant 0 : index
    %c0_2 = arith.constant 0 : index
    %1 = vector.load %arg3[%c0_1, %c0_2] : memref<1x8192xf32, #tpu.memory_space<vmem>>, vector<1x8192xf32>
    %2 = vector.broadcast %1 : vector<1x8192xf32> to vector<4x8192xf32>
    %3 = arith.addf %0, %2 : vector<4x8192xf32>
    %c0_3 = arith.constant 0 : index
    %c0_4 = arith.constant 0 : index
    %4 = vector.load %arg4[%c0_3, %c0_4] : memref<4x8192xf32, #tpu.memory_space<vmem>>, vector<4x8192xf32>
    tpu.vector_store %arg4[%c0_3, %c0_4], %3 {strides = array<i32>} : memref<4x8192xf32, #tpu.memory_space<vmem>>, vector<4x8192xf32>,
    return
  }
  func.func @transform_0(%arg0: i32, %arg1: i32) -> (i32, i32) {
    %c0_i32 = arith.constant 0 : i32
    return %arg0, %arg1 : i32, i32
  }
  func.func @transform_1(%arg0: i32, %arg1: i32) -> (i32, i32) {
    %c0_i32 = arith.constant 0 : i32
    %c0_i32_0 = arith.constant 0 : i32
    return %c0_i32, %arg1 : i32, i32
  }
  func.func @transform_2(%arg0: i32, %arg1: i32) -> (i32, i32) {
    %c0_i32 = arith.constant 0 : i32
    return %arg0, %arg1 : i32, i32
  }
}

</mosaic_0001>

<llo_original>
// kernel: _lambda_.1
$region0: #{_lambda_.1}
  #allocation0 [shape = 'u32[]', space=smem, size = 0x4, offset = 0x4, fixed_abs, tag = 'smem constant byte address 0x4 - core index']
  #allocation1 [shape = 'u32[144,128]{1,0:T(1,128)}', space=vmem, size = 0x12000, scoped, tag = 'internal scratch']
  %s0 = inlined_call_operand.vmem [shape: f32[4,16384], index: 0, kind: input, shape index: {}]
  %s1 = inlined_call_operand.vmem [shape: f32[1,16384], index: 1, kind: input, shape index: {}]
  %s2 = inlined_call_operand.vmem [shape: f32[4,16384], index: 2, kind: output, shape index: {}]
  %s3 = sld [smem:[#allocation0]]
  $region41: #{_lambda_.1} parent=0
    _
  %s5 = ssub.s32 1, %s3
  %s6 = scalar_select 0, %s5, %s3
  loop: start=0, step=1, limit=4
  $region2: #{_lambda_.1} parent=0 // loop_pre_header
    _
  $region3: #{_lambda_.1} parent=0 // loop_header
    %s8 = sphi 0, %s12
    %p9 = scmp.ge.s32.totalorder %s8, 4
    %s15 = sphi 0, %s27
    %s16 = sphi 0, %s23
    %s17 = sphi 0, %s15
    %s18 = sphi 0, %s16
    %s19 = sphi 0, %s17
    %s20 = sphi 0, %s18
    %s32 = sphi 0, %s34
    %s35 = sphi 0, %s32
    %s36 = sphi 0, %s35
    %s52 = sphi 0, %s36
    %s58 = sphi 0, %s60
    %s61 = sphi 0, %s58
    %s62 = sphi 0, %s61
    %s78 = sphi 0, %s62
    %s86 = sphi 0, %s88
    %s89 = sphi 0, %s86
    %s90 = sphi 0, %s89
    %s106 = sphi 0, %s90
  $region4: #{_lambda_.1} parent=0 // loop_header_branch
    %11 = sbr.rel (%p9) target = $region8
  $region5: #{_lambda_.1} parent=0 // loop_body
    %s13 = ssub.s32 %s8, 1
    %s14 = ssub.s32 %s8, 2
    %s21 = sadd.s32 1, %s16
    %p22 = scmp.ge.s32.totalorder %s21, 2
    %s23 = scalar_select %p22, 0, %s21
    %s24 = sadd.s32 1, %s15
    %s25 = scalar_select %p22, %s24, %s15
    %p26 = scmp.ge.s32.totalorder %s25, 1
    %s27 = scalar_select %p26, 0, %s25
    %s28 = ssub.s32 %s15, %s27
    %s29 = ssub.s32 %s16, %s23
    %s30 = sor.u32 %s28, %s29
    %p31 = scmp.eq.s32.totalorder %s30, 0
    %s33 = sadd.s32 %s32, 1
    %s34 = scalar_select %p31, %s32, %s33
    %p37 = pneg %p31
    %p38 = scmp.eq.s32.totalorder %s8, 1
    %p39 = por %p37, %p38
    %p40 = scmp.ne.s32.totalorder %s32, %s35
    %p41 = scmp.eq.s32.totalorder %s8, 0
    %p42 = por %p40, %p41
    %p43 = scmp.ne.s32.totalorder %s32, %s35
    %p44 = scmp.eq.s32.totalorder %s13, 1
    %p45 = por %p43, %p44
    %p46 = scmp.ne.s32.totalorder %s35, %s36
    %p47 = scmp.eq.s32.totalorder %s13, 0
    %p48 = por %p46, %p47
    %p49 = scmp.ne.s32.totalorder %s35, %s36
    %p50 = scmp.eq.s32.totalorder %s14, 1
    %p51 = por %p49, %p50
    %p53 = scmp.ne.s32.totalorder %s36, %s52
    %p54 = scmp.eq.s32.totalorder %s14, 0
    %p55 = por %p53, %p54
    %s56 = ssub.s32 %s16, %s23
    %p57 = scmp.eq.s32.totalorder %s56, 0
    %s59 = sadd.s32 %s58, 1
    %s60 = scalar_select %p57, %s58, %s59
    %p63 = pneg %p57
    %p64 = scmp.eq.s32.totalorder %s8, 1
    %p65 = por %p63, %p64
    %p66 = scmp.ne.s32.totalorder %s58, %s61
    %p67 = scmp.eq.s32.totalorder %s8, 0
    %p68 = por %p66, %p67
    %p69 = scmp.ne.s32.totalorder %s58, %s61
    %p70 = scmp.eq.s32.totalorder %s13, 1
    %p71 = por %p69, %p70
    %p72 = scmp.ne.s32.totalorder %s61, %s62
    %p73 = scmp.eq.s32.totalorder %s13, 0
    %p74 = por %p72, %p73
    %p75 = scmp.ne.s32.totalorder %s61, %s62
    %p76 = scmp.eq.s32.totalorder %s14, 1
    %p77 = por %p75, %p76
    %p79 = scmp.ne.s32.totalorder %s62, %s78
    %p80 = scmp.eq.s32.totalorder %s14, 0
    %p81 = por %p79, %p80
    %s82 = ssub.s32 %s15, %s27
    %s83 = ssub.s32 %s16, %s23
    %s84 = sor.u32 %s82, %s83
    %p85 = scmp.eq.s32.totalorder %s84, 0
    %s87 = sadd.s32 %s86, 1
    %s88 = scalar_select %p85, %s86, %s87
    %p91 = pneg %p85
    %p92 = scmp.eq.s32.totalorder %s8, 1
    %p93 = por %p91, %p92
    %p94 = scmp.ne.s32.totalorder %s86, %s89
    %p95 = scmp.eq.s32.totalorder %s8, 0
    %p96 = por %p94, %p95
    %p97 = scmp.ne.s32.totalorder %s86, %s89
    %p98 = scmp.eq.s32.totalorder %s13, 1
    %p99 = por %p97, %p98
    %p100 = scmp.ne.s32.totalorder %s89, %s90
    %p101 = scmp.eq.s32.totalorder %s13, 0
    %p102 = por %p100, %p101
    %p103 = scmp.ne.s32.totalorder %s89, %s90
    %p104 = scmp.eq.s32.totalorder %s14, 1
    %p105 = por %p103, %p104
    %p107 = scmp.ne.s32.totalorder %s90, %s106
    %p108 = scmp.eq.s32.totalorder %s14, 0
    %p109 = por %p107, %p108
    %p110 = scmp.le.s32.totalorder 1, %s8
    %p111 = scmp.lt.s32.totalorder %s8, 3
    %p112 = pnand %p110, %p111
    %p113 = pneg %p112
    // Predicated region
    $region9: #{_lambda_.1} parent=5 // pred_check
      _
    $region10: #{_lambda_.1} parent=5 // pred_check_branch
      %115 = sbr.rel (%p112) target = $region12
    $region11: #{_lambda_.1} parent=5 // pred_region
      %s116 = ssub.s32 %s8, 1
    $region12: #{_lambda_.1} parent=5 // pred_fallthru
      _
    %p117 = scmp.lt.s32.totalorder %s8, 2
    // Predicated region
    $region13: #{_lambda_.1} parent=5 // pred_check
      %p118 = pneg %p117
    $region14: #{_lambda_.1} parent=5 // pred_check_branch
      %120 = sbr.rel (%p118) target = $region16
    $region15: #{_lambda_.1} parent=5 // pred_region
      // Predicated region
      $region17: #{_lambda_.1} parent=15 // pred_check
        %p121 = pneg %p42
      $region18: #{_lambda_.1} parent=15 // pred_check_branch
        %123 = sbr.rel (%p121) target = $region20
      $region19: #{_lambda_.1} parent=15 // pred_region
        %s124 = smul.u32 64, %s16
        %p125 = scmp.lt.s32.totalorder %s15, 0
        %s126 = scalar_select %p125, %s15, 0
        %p127 = scmp.lt.s32.totalorder %s124, 127
        %s128 = scalar_select %p127, %s124, 127
        %s129 = smul.addr %s126, 128
        %s130 = sadd.s32 %s128, %s129
        %s131 = smul.addr %s130, 4
        %s132 = scalar_lea.vmem %s0, %s131
        %s133 = smul.u32 64, %s16
      $region20: #{_lambda_.1} parent=15 // pred_fallthru
        _
      // Predicated region
      $region21: #{_lambda_.1} parent=15 // pred_check
        %p134 = pneg %p68
      $region22: #{_lambda_.1} parent=15 // pred_check_branch
        %136 = sbr.rel (%p134) target = $region24
      $region23: #{_lambda_.1} parent=15 // pred_region
        %s137 = smul.u32 64, %s16
        %p138 = scmp.lt.s32.totalorder %s137, 127
        %s139 = scalar_select %p138, %s137, 127
        %s140 = scalar_lea.vmem %s1, %s139
        %s141 = smul.u32 64, %s16
      $region24: #{_lambda_.1} parent=15 // pred_fallthru
        _
    $region16: #{_lambda_.1} parent=5 // pred_fallthru
      _
    %p142 = scmp.le.s32.totalorder 1, %s8
    %p143 = scmp.lt.s32.totalorder %s8, 3
    %p144 = pnand %p142, %p143
    %p145 = pneg %p144
    // Predicated region
    $region25: #{_lambda_.1} parent=5 // pred_check
      _
    $region26: #{_lambda_.1} parent=5 // pred_check_branch
      %147 = sbr.rel (%p144) target = $region28
    $region27: #{_lambda_.1} parent=5 // pred_region
      %s148 = ssub.s32 %s8, 1
      %s149 = smul.u32 64, %s18
      %p150 = scmp.lt.s32.totalorder %s17, 0
      %s151 = scalar_select %p150, %s17, 0
      %p152 = scmp.lt.s32.totalorder %s149, 127
      %s153 = scalar_select %p152, %s149, 127
      %s154 = smul.addr %s151, 128
      %s155 = sadd.s32 %s153, %s154
      %s156 = smul.addr %s155, 4
      %s157 = scalar_lea.vmem %s0, %s156
      %p158 = pneg %p48
      %p159 = pneg %p45
      %s160 = smul.u32 64, %s18
      %p161 = scmp.lt.s32.totalorder %s160, 127
      %s162 = scalar_select %p161, %s160, 127
      %s163 = scalar_lea.vmem %s1, %s162
      %p164 = pneg %p74
      %p165 = pneg %p71
      %p166 = pneg %p102
      %p167 = pneg %p99
      %s168 = smul.u32 64, %s18
      %p169 = scmp.lt.s32.totalorder %s17, 0
      %s170 = scalar_select %p169, %s17, 0
      %p171 = scmp.lt.s32.totalorder %s168, 127
      %s172 = scalar_select %p171, %s168, 127
      %s173 = smul.addr %s170, 128
      %s174 = sadd.s32 %s172, %s173
      %s175 = smul.addr %s174, 4
      %s176 = scalar_lea.vmem %s2, %s175
      %s177 = smul.u32 64, %s18
      %p178 = scmp.lt.s32.totalorder %s17, 0
      %s179 = scalar_select %p178, %s17, 0
      %p180 = scmp.lt.s32.totalorder %s177, 127
      %s181 = scalar_select %p180, %s177, 127
      %s182 = smul.addr %s179, 128
      %s183 = sadd.s32 %s181, %s182
      %s184 = smul.addr %s183, 4
      %s185 = scalar_lea.vmem %s0, %s184
      %s186 = smul.u32 64, %s18
      %s187 = smul.u32 64, %s18
      %p188 = scmp.lt.s32.totalorder %s187, 127
      %s189 = scalar_select %p188, %s187, 127
      %s190 = scalar_lea.vmem %s1, %s189
      %s191 = smul.u32 64, %s18
      %s192 = smul.u32 64, %s18
      %p193 = scmp.lt.s32.totalorder %s17, 0
      %s194 = scalar_select %p193, %s17, 0
      %p195 = scmp.lt.s32.totalorder %s192, 127
      %s196 = scalar_select %p195, %s192, 127
      %s197 = smul.addr %s194, 128
      %s198 = sadd.s32 %s196, %s197
      %s199 = smul.addr %s198, 4
      %s200 = scalar_lea.vmem %s2, %s199
      %s201 = smul.u32 64, %s18
      %v202 = vld [vmem:[%s185] sm:$0xff]
      %v203 = vld [vmem:[%s185 + $0x8] sm:$0xff]
      %v204 = vld [vmem:[%s185 + $0x10] sm:$0xff]
      %v205 = vld [vmem:[%s185 + $0x18] sm:$0xff]
      %v206 = vld [vmem:[%s185 + $0x20] sm:$0xff]
      %v207 = vld [vmem:[%s185 + $0x28] sm:$0xff]
      %v208 = vld [vmem:[%s185 + $0x30] sm:$0xff]
      %v209 = vld [vmem:[%s185 + $0x38] sm:$0xff]
      %v210 = vld [vmem:[%s185 + $0x40] sm:$0xff]
      %v211 = vld [vmem:[%s185 + $0x48] sm:$0xff]
      %v212 = vld [vmem:[%s185 + $0x50] sm:$0xff]
      %v213 = vld [vmem:[%s185 + $0x58] sm:$0xff]
      %v214 = vld [vmem:[%s185 + $0x60] sm:$0xff]
      %v215 = vld [vmem:[%s185 + $0x68] sm:$0xff]
      %v216 = vld [vmem:[%s185 + $0x70] sm:$0xff]
      %v217 = vld [vmem:[%s185 + $0x78] sm:$0xff]
      %v218 = vld [vmem:[%s185 + $0x80] sm:$0xff]
      %v219 = vld [vmem:[%s185 + $0x88] sm:$0xff]
      %v220 = vld [vmem:[%s185 + $0x90] sm:$0xff]
      %v221 = vld [vmem:[%s185 + $0x98] sm:$0xff]
      %v222 = vld [vmem:[%s185 + $0xa0] sm:$0xff]
      %v223 = vld [vmem:[%s185 + $0xa8] sm:$0xff]
      %v224 = vld [vmem:[%s185 + $0xb0] sm:$0xff]
      %v225 = vld [vmem:[%s185 + $0xb8] sm:$0xff]
      %v226 = vld [vmem:[%s185 + $0xc0] sm:$0xff]
      %v227 = vld [vmem:[%s185 + $0xc8] sm:$0xff]
      %v228 = vld [vmem:[%s185 + $0xd0] sm:$0xff]
      %v229 = vld [vmem:[%s185 + $0xd8] sm:$0xff]
      %v230 = vld [vmem:[%s185 + $0xe0] sm:$0xff]
      %v231 = vld [vmem:[%s185 + $0xe8] sm:$0xff]
      %v232 = vld [vmem:[%s185 + $0xf0] sm:$0xff]
      %v233 = vld [vmem:[%s185 + $0xf8] sm:$0xff]
      %v234 = vld [vmem:[%s190] sm:$0xff]
      %v235 = vld [vmem:[%s190 + $0x8] sm:$0xff]
      %v236 = vld [vmem:[%s190 + $0x10] sm:$0xff]
      %v237 = vld [vmem:[%s190 + $0x18] sm:$0xff]
      %v238 = vld [vmem:[%s190 + $0x20] sm:$0xff]
      %v239 = vld [vmem:[%s190 + $0x28] sm:$0xff]
      %v240 = vld [vmem:[%s190 + $0x30] sm:$0xff]
      %v241 = vld [vmem:[%s190 + $0x38] sm:$0xff]
      %v250 = vlaneseq
      %v251 = vshrl.u32 %v250, 7
      %v252 = vsub.s32 0, %v251
      %v253 = vrot.slane %v234, %v252
      %v254 = vlaneseq
      %v255 = vshrl.u32 %v254, 7
      %v256 = vsub.s32 1, %v255
      %v257 = vrot.slane %v234, %v256
      %v258 = vlaneseq
      %v259 = vshrl.u32 %v258, 7
      %v260 = vsub.s32 2, %v259
      %v261 = vrot.slane %v234, %v260
      %v262 = vlaneseq
      %v263 = vshrl.u32 %v262, 7
      %v264 = vsub.s32 3, %v263
      %v265 = vrot.slane %v234, %v264
      %v266 = vlaneseq
      %v267 = vshrl.u32 %v266, 7
      %v268 = vsub.s32 4, %v267
      %v269 = vrot.slane %v234, %v268
      %v270 = vlaneseq
      %v271 = vshrl.u32 %v270, 7
      %v272 = vsub.s32 5, %v271
      %v273 = vrot.slane %v234, %v272
      %v274 = vlaneseq
      %v275 = vshrl.u32 %v274, 7
      %v276 = vsub.s32 6, %v275
      %v277 = vrot.slane %v234, %v276
      %v278 = vlaneseq
      %v279 = vshrl.u32 %v278, 7
      %v280 = vsub.s32 7, %v279
      %v281 = vrot.slane %v234, %v280
      %v282 = vlaneseq
      %v283 = vshrl.u32 %v282, 7
      %v284 = vsub.s32 0, %v283
      %v285 = vrot.slane %v235, %v284
      %v286 = vlaneseq
      %v287 = vshrl.u32 %v286, 7
      %v288 = vsub.s32 1, %v287
      %v289 = vrot.slane %v235, %v288
      %v290 = vlaneseq
      %v291 = vshrl.u32 %v290, 7
      %v292 = vsub.s32 2, %v291
      %v293 = vrot.slane %v235, %v292
      %v294 = vlaneseq
      %v295 = vshrl.u32 %v294, 7
      %v296 = vsub.s32 3, %v295
      %v297 = vrot.slane %v235, %v296
      %v298 = vlaneseq
      %v299 = vshrl.u32 %v298, 7
      %v300 = vsub.s32 4, %v299
      %v301 = vrot.slane %v235, %v300
      %v302 = vlaneseq
      %v303 = vshrl.u32 %v302, 7
      %v304 = vsub.s32 5, %v303
      %v305 = vrot.slane %v235, %v304
      %v306 = vlaneseq
      %v307 = vshrl.u32 %v306, 7
      %v308 = vsub.s32 6, %v307
      %v309 = vrot.slane %v235, %v308
      %v310 = vlaneseq
      %v311 = vshrl.u32 %v310, 7
      %v312 = vsub.s32 7, %v311
      %v313 = vrot.slane %v235, %v312
      %v314 = vlaneseq
      %v315 = vshrl.u32 %v314, 7
      %v316 = vsub.s32 0, %v315
      %v317 = vrot.slane %v236, %v316
      %v318 = vlaneseq
      %v319 = vshrl.u32 %v318, 7
      %v320 = vsub.s32 1, %v319
      %v321 = vrot.slane %v236, %v320
      %v322 = vlaneseq
      %v323 = vshrl.u32 %v322, 7
      %v324 = vsub.s32 2, %v323
      %v325 = vrot.slane %v236, %v324
      %v326 = vlaneseq
      %v327 = vshrl.u32 %v326, 7
      %v328 = vsub.s32 3, %v327
      %v329 = vrot.slane %v236, %v328
      %v330 = vlaneseq
      %v331 = vshrl.u32 %v330, 7
      %v332 = vsub.s32 4, %v331
      %v333 = vrot.slane %v236, %v332
      %v334 = vlaneseq
      %v335 = vshrl.u32 %v334, 7
      %v336 = vsub.s32 5, %v335
      %v337 = vrot.slane %v236, %v336
      %v338 = vlaneseq
      %v339 = vshrl.u32 %v338, 7
      %v340 = vsub.s32 6, %v339
      %v341 = vrot.slane %v236, %v340
      %v342 = vlaneseq
      %v343 = vshrl.u32 %v342, 7
      %v344 = vsub.s32 7, %v343
      %v345 = vrot.slane %v236, %v344
      %v346 = vlaneseq
      %v347 = vshrl.u32 %v346, 7
      %v348 = vsub.s32 0, %v347
      %v349 = vrot.slane %v237, %v348
      %v350 = vlaneseq
      %v351 = vshrl.u32 %v350, 7
      %v352 = vsub.s32 1, %v351
      %v353 = vrot.slane %v237, %v352
      %v354 = vlaneseq
      %v355 = vshrl.u32 %v354, 7
      %v356 = vsub.s32 2, %v355
      %v357 = vrot.slane %v237, %v356
      %v358 = vlaneseq
      %v359 = vshrl.u32 %v358, 7
      %v360 = vsub.s32 3, %v359
      %v361 = vrot.slane %v237, %v360
      %v362 = vlaneseq
      %v363 = vshrl.u32 %v362, 7
      %v364 = vsub.s32 4, %v363
      %v365 = vrot.slane %v237, %v364
      %v366 = vlaneseq
      %v367 = vshrl.u32 %v366, 7
      %v368 = vsub.s32 5, %v367
      %v369 = vrot.slane %v237, %v368
      %v370 = vlaneseq
      %v371 = vshrl.u32 %v370, 7
      %v372 = vsub.s32 6, %v371
      %v373 = vrot.slane %v237, %v372
      %v374 = vlaneseq
      %v375 = vshrl.u32 %v374, 7
      %v376 = vsub.s32 7, %v375
      %v377 = vrot.slane %v237, %v376
      %v378 = vlaneseq
      %v379 = vshrl.u32 %v378, 7
      %v380 = vsub.s32 0, %v379
      %v381 = vrot.slane %v238, %v380
      %v382 = vlaneseq
      %v383 = vshrl.u32 %v382, 7
      %v384 = vsub.s32 1, %v383
      %v385 = vrot.slane %v238, %v384
      %v386 = vlaneseq
      %v387 = vshrl.u32 %v386, 7
      %v388 = vsub.s32 2, %v387
      %v389 = vrot.slane %v238, %v388
      %v390 = vlaneseq
      %v391 = vshrl.u32 %v390, 7
      %v392 = vsub.s32 3, %v391
      %v393 = vrot.slane %v238, %v392
      %v394 = vlaneseq
      %v395 = vshrl.u32 %v394, 7
      %v396 = vsub.s32 4, %v395
      %v397 = vrot.slane %v238, %v396
      %v398 = vlaneseq
      %v399 = vshrl.u32 %v398, 7
      %v400 = vsub.s32 5, %v399
      %v401 = vrot.slane %v238, %v400
      %v402 = vlaneseq
      %v403 = vshrl.u32 %v402, 7
      %v404 = vsub.s32 6, %v403
      %v405 = vrot.slane %v238, %v404
      %v406 = vlaneseq
      %v407 = vshrl.u32 %v406, 7
      %v408 = vsub.s32 7, %v407
      %v409 = vrot.slane %v238, %v408
      %v410 = vlaneseq
      %v411 = vshrl.u32 %v410, 7
      %v412 = vsub.s32 0, %v411
      %v413 = vrot.slane %v239, %v412
      %v414 = vlaneseq
      %v415 = vshrl.u32 %v414, 7
      %v416 = vsub.s32 1, %v415
      %v417 = vrot.slane %v239, %v416
      %v418 = vlaneseq
      %v419 = vshrl.u32 %v418, 7
      %v420 = vsub.s32 2, %v419
      %v421 = vrot.slane %v239, %v420
      %v422 = vlaneseq
      %v423 = vshrl.u32 %v422, 7
      %v424 = vsub.s32 3, %v423
      %v425 = vrot.slane %v239, %v424
      %v426 = vlaneseq
      %v427 = vshrl.u32 %v426, 7
      %v428 = vsub.s32 4, %v427
      %v429 = vrot.slane %v239, %v428
      %v430 = vlaneseq
      %v431 = vshrl.u32 %v430, 7
      %v432 = vsub.s32 5, %v431
      %v433 = vrot.slane %v239, %v432
      %v434 = vlaneseq
      %v435 = vshrl.u32 %v434, 7
      %v436 = vsub.s32 6, %v435
      %v437 = vrot.slane %v239, %v436
      %v438 = vlaneseq
      %v439 = vshrl.u32 %v438, 7
      %v440 = vsub.s32 7, %v439
      %v441 = vrot.slane %v239, %v440
      %v442 = vlaneseq
      %v443 = vshrl.u32 %v442, 7
      %v444 = vsub.s32 0, %v443
      %v445 = vrot.slane %v240, %v444
      %v446 = vlaneseq
      %v447 = vshrl.u32 %v446, 7
      %v448 = vsub.s32 1, %v447
      %v449 = vrot.slane %v240, %v448
      %v450 = vlaneseq
      %v451 = vshrl.u32 %v450, 7
      %v452 = vsub.s32 2, %v451
      %v453 = vrot.slane %v240, %v452
      %v454 = vlaneseq
      %v455 = vshrl.u32 %v454, 7
      %v456 = vsub.s32 3, %v455
      %v457 = vrot.slane %v240, %v456
      %v458 = vlaneseq
      %v459 = vshrl.u32 %v458, 7
      %v460 = vsub.s32 4, %v459
      %v461 = vrot.slane %v240, %v460
      %v462 = vlaneseq
      %v463 = vshrl.u32 %v462, 7
      %v464 = vsub.s32 5, %v463
      %v465 = vrot.slane %v240, %v464
      %v466 = vlaneseq
      %v467 = vshrl.u32 %v466, 7
      %v468 = vsub.s32 6, %v467
      %v469 = vrot.slane %v240, %v468
      %v470 = vlaneseq
      %v471 = vshrl.u32 %v470, 7
      %v472 = vsub.s32 7, %v471
      %v473 = vrot.slane %v240, %v472
      %v474 = vlaneseq
      %v475 = vshrl.u32 %v474, 7
      %v476 = vsub.s32 0, %v475
      %v477 = vrot.slane %v241, %v476
      %v478 = vlaneseq
      %v479 = vshrl.u32 %v478, 7
      %v480 = vsub.s32 1, %v479
      %v481 = vrot.slane %v241, %v480
      %v482 = vlaneseq
      %v483 = vshrl.u32 %v482, 7
      %v484 = vsub.s32 2, %v483
      %v485 = vrot.slane %v241, %v484
      %v486 = vlaneseq
      %v487 = vshrl.u32 %v486, 7
      %v488 = vsub.s32 3, %v487
      %v489 = vrot.slane %v241, %v488
      %v490 = vlaneseq
      %v491 = vshrl.u32 %v490, 7
      %v492 = vsub.s32 4, %v491
      %v493 = vrot.slane %v241, %v492
      %v494 = vlaneseq
      %v495 = vshrl.u32 %v494, 7
      %v496 = vsub.s32 5, %v495
      %v497 = vrot.slane %v241, %v496
      %v498 = vlaneseq
      %v499 = vshrl.u32 %v498, 7
      %v500 = vsub.s32 6, %v499
      %v501 = vrot.slane %v241, %v500
      %v502 = vlaneseq
      %v503 = vshrl.u32 %v502, 7
      %v504 = vsub.s32 7, %v503
      %v505 = vrot.slane %v241, %v504
      %v506 = vcombine.low %v253, %v257
      %v507 = vcombine.low %v261, %v265
      %v508 = vcombine.low %v269, %v273
      %v509 = vcombine.low %v277, %v281
      %v510 = vcombine.low %v285, %v289
      %v511 = vcombine.low %v293, %v297
      %v512 = vcombine.low %v301, %v305
      %v513 = vcombine.low %v309, %v313
      %v514 = vcombine.low %v317, %v321
      %v515 = vcombine.low %v325, %v329
      %v516 = vcombine.low %v333, %v337
      %v517 = vcombine.low %v341, %v345
      %v518 = vcombine.low %v349, %v353
      %v519 = vcombine.low %v357, %v361
      %v520 = vcombine.low %v365, %v369
      %v521 = vcombine.low %v373, %v377
      %v522 = vcombine.low %v381, %v385
      %v523 = vcombine.low %v389, %v393
      %v524 = vcombine.low %v397, %v401
      %v525 = vcombine.low %v405, %v409
      %v526 = vcombine.low %v413, %v417
      %v527 = vcombine.low %v421, %v425
      %v528 = vcombine.low %v429, %v433
      %v529 = vcombine.low %v437, %v441
      %v530 = vcombine.low %v445, %v449
      %v531 = vcombine.low %v453, %v457
      %v532 = vcombine.low %v461, %v465
      %v533 = vcombine.low %v469, %v473
      %v534 = vcombine.low %v477, %v481
      %v535 = vcombine.low %v485, %v489
      %v536 = vcombine.low %v493, %v497
      %v537 = vcombine.low %v501, %v505
      %v570 = vadd.f32 %v202, %v506
      %v571 = vadd.f32 %v203, %v507
      %v572 = vadd.f32 %v204, %v508
      %v573 = vadd.f32 %v205, %v509
      %v574 = vadd.f32 %v206, %v510
      %v575 = vadd.f32 %v207, %v511
      %v576 = vadd.f32 %v208, %v512
      %v577 = vadd.f32 %v209, %v513
      %v578 = vadd.f32 %v210, %v514
      %v579 = vadd.f32 %v211, %v515
      %v580 = vadd.f32 %v212, %v516
      %v581 = vadd.f32 %v213, %v517
      %v582 = vadd.f32 %v214, %v518
      %v583 = vadd.f32 %v215, %v519
      %v584 = vadd.f32 %v216, %v520
      %v585 = vadd.f32 %v217, %v521
      %v586 = vadd.f32 %v218, %v522
      %v587 = vadd.f32 %v219, %v523
      %v588 = vadd.f32 %v220, %v524
      %v589 = vadd.f32 %v221, %v525
      %v590 = vadd.f32 %v222, %v526
      %v591 = vadd.f32 %v223, %v527
      %v592 = vadd.f32 %v224, %v528
      %v593 = vadd.f32 %v225, %v529
      %v594 = vadd.f32 %v226, %v530
      %v595 = vadd.f32 %v227, %v531
      %v596 = vadd.f32 %v228, %v532
      %v597 = vadd.f32 %v229, %v533
      %v598 = vadd.f32 %v230, %v534
      %v599 = vadd.f32 %v231, %v535
      %v600 = vadd.f32 %v232, %v536
      %v601 = vadd.f32 %v233, %v537
      %602 = vst [vmem:[%s200] sm:$0xff] %v570
      %603 = vst [vmem:[%s200 + $0x8] sm:$0xff] %v571
      %604 = vst [vmem:[%s200 + $0x10] sm:$0xff] %v572
      %605 = vst [vmem:[%s200 + $0x18] sm:$0xff] %v573
      %606 = vst [vmem:[%s200 + $0x20] sm:$0xff] %v574
      %607 = vst [vmem:[%s200 + $0x28] sm:$0xff] %v575
      %608 = vst [vmem:[%s200 + $0x30] sm:$0xff] %v576
      %609 = vst [vmem:[%s200 + $0x38] sm:$0xff] %v577
      %610 = vst [vmem:[%s200 + $0x40] sm:$0xff] %v578
      %611 = vst [vmem:[%s200 + $0x48] sm:$0xff] %v579
      %612 = vst [vmem:[%s200 + $0x50] sm:$0xff] %v580
      %613 = vst [vmem:[%s200 + $0x58] sm:$0xff] %v581
      %614 = vst [vmem:[%s200 + $0x60] sm:$0xff] %v582
      %615 = vst [vmem:[%s200 + $0x68] sm:$0xff] %v583
      %616 = vst [vmem:[%s200 + $0x70] sm:$0xff] %v584
      %617 = vst [vmem:[%s200 + $0x78] sm:$0xff] %v585
      %618 = vst [vmem:[%s200 + $0x80] sm:$0xff] %v586
      %619 = vst [vmem:[%s200 + $0x88] sm:$0xff] %v587
      %620 = vst [vmem:[%s200 + $0x90] sm:$0xff] %v588
      %621 = vst [vmem:[%s200 + $0x98] sm:$0xff] %v589
      %622 = vst [vmem:[%s200 + $0xa0] sm:$0xff] %v590
      %623 = vst [vmem:[%s200 + $0xa8] sm:$0xff] %v591
      %624 = vst [vmem:[%s200 + $0xb0] sm:$0xff] %v592
      %625 = vst [vmem:[%s200 + $0xb8] sm:$0xff] %v593
      %626 = vst [vmem:[%s200 + $0xc0] sm:$0xff] %v594
      %627 = vst [vmem:[%s200 + $0xc8] sm:$0xff] %v595
      %628 = vst [vmem:[%s200 + $0xd0] sm:$0xff] %v596
      %629 = vst [vmem:[%s200 + $0xd8] sm:$0xff] %v597
      %630 = vst [vmem:[%s200 + $0xe0] sm:$0xff] %v598
      %631 = vst [vmem:[%s200 + $0xe8] sm:$0xff] %v599
      %632 = vst [vmem:[%s200 + $0xf0] sm:$0xff] %v600
      %633 = vst [vmem:[%s200 + $0xf8] sm:$0xff] %v601
      %s634 = smul.u32 64, %s18
      %p635 = scmp.lt.s32.totalorder %s17, 0
      %s636 = scalar_select %p635, %s17, 0
      %p637 = scmp.lt.s32.totalorder %s634, 127
      %s638 = scalar_select %p637, %s634, 127
      %s639 = smul.addr %s636, 128
      %s640 = sadd.s32 %s638, %s639
      %s641 = smul.addr %s640, 4
      %s642 = scalar_lea.vmem %s2, %s641
      // Predicated region
      $region29: #{_lambda_.1} parent=27 // pred_check
        %p643 = pneg %p99
      $region30: #{_lambda_.1} parent=27 // pred_check_branch
        %645 = sbr.rel (%p643) target = $region32
      $region31: #{_lambda_.1} parent=27 // pred_region
        %s646 = smul.u32 64, %s18
      $region32: #{_lambda_.1} parent=27 // pred_fallthru
        _
    $region28: #{_lambda_.1} parent=5 // pred_fallthru
      _
    %p647 = scmp.le.s32.totalorder 2, %s8
    // Predicated region
    $region33: #{_lambda_.1} parent=5 // pred_check
      %p648 = pneg %p647
    $region34: #{_lambda_.1} parent=5 // pred_check_branch
      %650 = sbr.rel (%p648) target = $region36
    $region35: #{_lambda_.1} parent=5 // pred_region
      %s651 = ssub.s32 %s8, 2
      // Predicated region
      $region37: #{_lambda_.1} parent=35 // pred_check
        %p652 = pneg %p105
      $region38: #{_lambda_.1} parent=35 // pred_check_branch
        %654 = sbr.rel (%p652) target = $region40
      $region39: #{_lambda_.1} parent=35 // pred_region
        %s655 = smul.u32 64, %s20
        %p656 = scmp.lt.s32.totalorder %s19, 0
        %s657 = scalar_select %p656, %s19, 0
        %p658 = scmp.lt.s32.totalorder %s655, 127
        %s659 = scalar_select %p658, %s655, 127
        %s660 = smul.addr %s657, 128
        %s661 = sadd.s32 %s659, %s660
        %s662 = smul.addr %s661, 4
        %s663 = scalar_lea.vmem %s2, %s662
      $region40: #{_lambda_.1} parent=35 // pred_fallthru
        _
    $region36: #{_lambda_.1} parent=5 // pred_fallthru
      _
  $region6: #{_lambda_.1} parent=0 // loop_footer
    %s12 = sadd.s32 1, %s8
  $region7: #{_lambda_.1} parent=0 // loop_footer_branch
    %7 = sbr.rel target = $region3
  $region8: #{_lambda_.1} parent=0 // loop_exit
    _

</llo_original>
